<compile_context>
chip_gen: v7x
topology: tpu7x:2x2x1
jax: 0.10.0
libtpu: 0.0.40
codegen_flags: <defaults>
</compile_context>

<pallas_src>
import functools

import jax
import jax.numpy as jnp
from jax.experimental import pallas as pl
from jax.experimental.pallas import tpu as pltpu


def _round_up(a: int, b: int) -> int:
    return (a + b - 1) // b * b


def _sublane_multiple(dtype) -> int:
    # Min row multiple per vreg packing: 8 (32-bit), 16 (16-bit), 32 (8-bit).
    return 32 // jnp.dtype(dtype).itemsize


def _pick_tm(n: int, d: int, dtype, tile_bytes: int) -> int:
    """Row-tile size from a byte budget, sublane-rounded, grid>=2 when possible."""
    itemsize = jnp.dtype(dtype).itemsize
    sub = _sublane_multiple(dtype)
    tm = (tile_bytes // max(1, d * itemsize)) // sub * sub
    tm = max(tm, sub)
    # Keep at least 2 grid steps when the row count allows it, so the
    # "parallel" axis can be sharded across v7x's two TensorCores.
    if n >= 2 * sub:
        tm = min(tm, _round_up(pl.cdiv(n, 2), sub))
    tm = min(tm, _round_up(n, sub))
    return int(max(tm, sub))


def _vmem_limit(block_bytes: int, n_buffered_arrays: int) -> int:
    # Double-buffered tiles + f32 intermediate headroom, capped to ~half the
    # chip's VMEM (=> ~32 MiB on v7x's 64 MiB, up to 48 MiB on v5e/v6e).
    need = 2 * n_buffered_arrays * block_bytes + (8 << 20)
    try:
        cap = int(pltpu.get_tpu_info().vmem_capacity_bytes) // 2
    except Exception:  # emulator / older runtimes
        cap = 32 << 20
    cap = max(32 << 20, min(cap, 48 << 20))
    return int(min(max(need, 16 << 20), cap))


def _lane_dense_view(n: int, d: int):
    """Widest (rows, k*128) factorization of n*d elements (for elementwise ops)."""
    total = n * d
    for w in (4096, 2048, 1024, 512, 256, 128):
        if total % w == 0:
            return total // w, w
    return n, d  # fall back to the original shape (masked stores if d < 128)


# ---------------------------------------------------------------------------
# Kernel 1: LayerNorm (torch semantics: unbiased std, eps added to std)
# ---------------------------------------------------------------------------
def layernorm_kernel(x_ref, a_ref, b_ref, o_ref, *, eps):
    # x_ref: (tm, d) row tile; a_ref/b_ref: (1, d) resident scale/shift.
    x = x_ref[...].astype(jnp.float32)
    d = x.shape[-1]
    # Single pass: sum(x) and sum(x*x) together (one stream of the tile).
    s1 = jnp.sum(x, axis=-1, keepdims=True)
    s2 = jnp.sum(x * x, axis=-1, keepdims=True)
    mean = s1 * (1.0 / d)
    # torch Tensor.std() is unbiased: divide by (d - 1).
    inv_dm1 = (1.0 / (d - 1)) if d > 1 else float("nan")
    var = jnp.maximum(s2 - mean * s1, 0.0) * inv_dm1
    std = jnp.sqrt(var)
    # Exact reciprocal keeps numerics within torch tolerance; approx=True would
    # move it onto the EUP slot at a small accuracy cost.
    inv = pl.reciprocal(std + eps, approx=False)
    y = (x - mean) * inv * a_ref[...].astype(jnp.float32) \
        + b_ref[...].astype(jnp.float32)
    o_ref[...] = y.astype(o_ref.dtype)


# ---------------------------------------------------------------------------
# Kernel 2: residual add with (eval-mode) dropout
# ---------------------------------------------------------------------------
def residual_dropout_add_kernel(x_ref, s_ref, o_ref):
    # TODO(synk): dropout is eval-mode identity; training mode would build a
    # keep-mask via pltpu.prng_seed + pltpu.prng_random_bits and scale by 1/(1-p).
    o_ref[...] = x_ref[...] + s_ref[...]


# ---------------------------------------------------------------------------
# Pallas wrappers
# ---------------------------------------------------------------------------
def _layer_norm_2d(xf, a_r, b_r, *, eps, tile_bytes):
    n, d = xf.shape
    itemsize = xf.dtype.itemsize
    tm = _pick_tm(n, d, xf.dtype, tile_bytes)
    block_bytes = tm * d * itemsize
    return pl.pallas_call(
        functools.partial(layernorm_kernel, eps=eps),
        out_shape=jax.ShapeDtypeStruct((n, d), xf.dtype),
        grid_spec=pltpu.PrefetchScalarGridSpec(
            num_scalar_prefetch=0,
            grid=(pl.cdiv(n, tm),),  # partial last block masked by Pallas
            in_specs=[
                pl.BlockSpec((tm, d), lambda i: (i, 0)),   # x rows
                pl.BlockSpec((1, d), lambda i: (0, 0)),    # a_2 (VMEM resident)
                pl.BlockSpec((1, d), lambda i: (0, 0)),    # b_2 (VMEM resident)
            ],
            out_specs=pl.BlockSpec((tm, d), lambda i: (i, 0)),
        ),
        compiler_params=pltpu.CompilerParams(
            dimension_semantics=("parallel",),
            vmem_limit_bytes=_vmem_limit(block_bytes, n_buffered_arrays=2),
        ),
        cost_estimate=pl.CostEstimate(
            flops=8 * n * d,
            transcendentals=2 * n,
            bytes_accessed=(2 * n * d + 2 * d) * itemsize,
        ),
    )(xf, a_r, b_r)


def _residual_add_2d(xf, sf, *, tile_bytes):
    n, d = xf.shape
    rows, width = _lane_dense_view(n, d)   # elementwise => layout-free reshape
    xr = xf.reshape(rows, width)
    sr = sf.reshape(rows, width)
    itemsize = xr.dtype.itemsize
    tm = _pick_tm(rows, width, xr.dtype, tile_bytes)
    block_bytes = tm * width * itemsize
    out = pl.pallas_call(
        residual_dropout_add_kernel,
        out_shape=jax.ShapeDtypeStruct((rows, width), xr.dtype),
        grid_spec=pltpu.PrefetchScalarGridSpec(
            num_scalar_prefetch=0,
            grid=(pl.cdiv(rows, tm),),  # partial last block masked by Pallas
            in_specs=[
                pl.BlockSpec((tm, width), lambda i: (i, 0)),   # x
                pl.BlockSpec((tm, width), lambda i: (i, 0)),   # sublayer output
            ],
            out_specs=pl.BlockSpec((tm, width), lambda i: (i, 0)),
        ),
        compiler_params=pltpu.CompilerParams(
            dimension_semantics=("parallel",),
            vmem_limit_bytes=_vmem_limit(block_bytes, n_buffered_arrays=3),
        ),
        cost_estimate=pl.CostEstimate(
            flops=n * d,
            transcendentals=0,
            bytes_accessed=3 * n * d * itemsize,
        ),
    )(xr, sr)
    return out.reshape(n, d)


def sublayer_connection(x, a_2, b_2, sublayer, *, eps=1e-6, tile_bytes=2 << 20):
    """out = x + dropout(sublayer(LayerNorm(x))), dropout in eval mode.

    x: (..., d).  a_2, b_2: (d,) LayerNorm scale/shift.
    sublayer: any JAX callable mapping (..., d) -> (..., d).
    """
    orig_shape = x.shape
    d = orig_shape[-1]
    xf = x.reshape(-1, d)

    a_r = jnp.asarray(a_2, x.dtype).reshape(1, d)
    b_r = jnp.asarray(b_2, x.dtype).reshape(1, d)

    # 1) pre-norm (Pallas) — no host-side padding / slicing.
    normed = _layer_norm_2d(xf, a_r, b_r, eps=eps, tile_bytes=tile_bytes)

    # 2) arbitrary user sublayer (plain JAX; cannot be fused generically).
    s = sublayer(normed.reshape(orig_shape))

    # 3) residual add + (eval-mode) dropout (Pallas, lane-dense slab).
    # TODO(synk): when the sublayer is itself a Pallas kernel, fuse `+ x` into
    # its epilogue instead of this separate pass to save one full HBM read.
    out = _residual_add_2d(xf, s.reshape(-1, d), tile_bytes=tile_bytes)
    return out.reshape(orig_shape)


if __name__ == "__main__":
    # Small shapes consistent with the module's forward: (batch, seq, size)
    batch, seq, d_model = 2, 8, 32
    eps = 1e-6

    key = jax.random.PRNGKey(0)
    kx, ka, kb, kws, kbs = jax.random.split(key, 5)

    x = jax.random.normal(kx, (batch, seq, d_model), dtype=jnp.float32)

    # LayerNorm parameters (torch init is ones/zeros; perturb so scale/shift are
    # actually exercised).
    a_2 = 1.0 + 0.1 * jax.random.normal(ka, (d_model,), jnp.float32)
    b_2 = 0.1 * jax.random.normal(kb, (d_model,), jnp.float32)

    # Demo sublayer: a simple linear projection (any JAX callable works here).
    lim = 1.0 / (d_model ** 0.5)
    w_s = jax.random.uniform(kws, (d_model, d_model), jnp.float32, -lim, lim)
    b_s = jax.random.uniform(kbs, (d_model,), jnp.float32, -lim, lim)
    sublayer = lambda t: t @ w_s.T + b_s

    y = sublayer_connection(x, a_2, b_2, sublayer, eps=eps)
    y = jax.block_until_ready(y)

    # Pure-JAX reference of the PyTorch forward (eval-mode dropout == identity).
    mean = x.mean(-1, keepdims=True)
    var = ((x - mean) ** 2).sum(-1, keepdims=True) / (d_model - 1)  # unbiased std
    std = jnp.sqrt(var)
    normed_ref = a_2 * (x - mean) / (std + eps) + b_2
    ref = x + sublayer(normed_ref)

    assert y.shape == x.shape
    assert jnp.allclose(y, ref, atol=1e-5, rtol=1e-5)

    print("KERNEL_OK")
</pallas_src>

<mosaic_0001>
module attributes {stable_mosaic.version = 11 : i64} {
  func.func @layernorm_kernel(%arg0: i32, %arg1: memref<8x32xf32, #tpu.memory_space<vmem>>, %arg2: memref<1x32xf32, #tpu.memory_space<vmem>>, %arg3: memref<1x32xf32, #tpu.memory_space<vmem>>, %arg4: memref<8x32xf32, #tpu.memory_space<vmem>>) attributes {dimension_semantics = [#tpu.dimension_semantics<parallel>], iteration_bounds = array<i64: 2>, scalar_prefetch = 0 : i64, scratch_operands = 0 : i64, tpu.core_type = #tpu.core_type<tc>, window_params = [{transform_indices = @transform_0, window_bounds = array<i64: 8, 32>}, {pipeline_mode = #tpu.pipeline_mode<synchronous>, transform_indices = @transform_1, window_bounds = array<i64: 1, 32>}, {pipeline_mode = #tpu.pipeline_mode<synchronous>, transform_indices = @transform_2, window_bounds = array<i64: 1, 32>}, {transform_indices = @transform_3, window_bounds = array<i64: 8, 32>}]} {
    %c0 = arith.constant 0 : index
    %c0_0 = arith.constant 0 : index
    %0 = vector.load %arg1[%c0, %c0_0] : memref<8x32xf32, #tpu.memory_space<vmem>>, vector<8x32xf32>
    %cst = arith.constant dense<0.000000e+00> : vector<8xf32>
    %1 = vector.multi_reduction <add>, %0, %cst [1] : vector<8x32xf32> to vector<8xf32>
    %2 = vector.shape_cast %1 : vector<8xf32> to vector<8x1xf32>
    %3 = arith.mulf %0, %0 : vector<8x32xf32>
    %cst_1 = arith.constant dense<0.000000e+00> : vector<8xf32>
    %4 = vector.multi_reduction <add>, %3, %cst_1 [1] : vector<8x32xf32> to vector<8xf32>
    %5 = vector.shape_cast %4 : vector<8xf32> to vector<8x1xf32>
    %cst_2 = arith.constant 3.125000e-02 : f32
    %6 = vector.broadcast %cst_2 : f32 to vector<8x1xf32>
    %7 = arith.mulf %2, %6 : vector<8x1xf32>
    %8 = arith.mulf %7, %2 : vector<8x1xf32>
    %9 = arith.subf %5, %8 : vector<8x1xf32>
    %cst_3 = arith.constant 0.000000e+00 : f32
    %10 = vector.broadcast %cst_3 : f32 to vector<8x1xf32>
    %11 = arith.maximumf %9, %10 : vector<8x1xf32>
    %cst_4 = arith.constant 0.0322580636 : f32
    %12 = vector.broadcast %cst_4 : f32 to vector<8x1xf32>
    %13 = arith.mulf %11, %12 : vector<8x1xf32>
    %14 = math.sqrt %13 : vector<8x1xf32>
    %cst_5 = arith.constant 9.99999997E-7 : f32
    %15 = vector.broadcast %cst_5 : f32 to vector<8x1xf32>
    %16 = arith.addf %14, %15 : vector<8x1xf32>
    %17 = tpu.reciprocal %16 : vector<8x1xf32> -> vector<8x1xf32>
    %18 = vector.broadcast %7 : vector<8x1xf32> to vector<8x32xf32>
    %19 = arith.subf %0, %18 : vector<8x32xf32>
    %20 = vector.broadcast %17 : vector<8x1xf32> to vector<8x32xf32>
    %21 = arith.mulf %19, %20 : vector<8x32xf32>
    %c0_6 = arith.constant 0 : index
    %c0_7 = arith.constant 0 : index
    %22 = vector.load %arg2[%c0_6, %c0_7] : memref<1x32xf32, #tpu.memory_space<vmem>>, vector<1x32xf32>
    %23 = vector.broadcast %22 : vector<1x32xf32> to vector<8x32xf32>
    %24 = arith.mulf %21, %23 : vector<8x32xf32>
    %c0_8 = arith.constant 0 : index
    %c0_9 = arith.constant 0 : index
    %25 = vector.load %arg3[%c0_8, %c0_9] : memref<1x32xf32, #tpu.memory_space<vmem>>, vector<1x32xf32>
    %26 = vector.broadcast %25 : vector<1x32xf32> to vector<8x32xf32>
    %27 = arith.addf %24, %26 : vector<8x32xf32>
    %c0_10 = arith.constant 0 : index
    %c0_11 = arith.constant 0 : index
    %28 = vector.load %arg4[%c0_10, %c0_11] : memref<8x32xf32, #tpu.memory_space<vmem>>, vector<8x32xf32>
    tpu.vector_store %arg4[%c0_10, %c0_11], %27 {strides = array<i32>} : memref<8x32xf32, #tpu.memory_space<vmem>>, vector<8x32xf32>,
    return
  }
  func.func @transform_0(%arg0: i32) -> (i32, i32) {
    %c0_i32 = arith.constant 0 : i32
    %c0_i32_0 = arith.constant 0 : i32
    return %arg0, %c0_i32 : i32, i32
  }
  func.func @transform_1(%arg0: i32) -> (i32, i32) {
    %c0_i32 = arith.constant 0 : i32
    %c0_i32_0 = arith.constant 0 : i32
    %c0_i32_1 = arith.constant 0 : i32
    return %c0_i32, %c0_i32_0 : i32, i32
  }
  func.func @transform_2(%arg0: i32) -> (i32, i32) {
    %c0_i32 = arith.constant 0 : i32
    %c0_i32_0 = arith.constant 0 : i32
    %c0_i32_1 = arith.constant 0 : i32
    return %c0_i32, %c0_i32_0 : i32, i32
  }
  func.func @transform_3(%arg0: i32) -> (i32, i32) {
    %c0_i32 = arith.constant 0 : i32
    %c0_i32_0 = arith.constant 0 : i32
    return %arg0, %c0_i32 : i32, i32
  }
}

</mosaic_0001>

<llo_original>
// kernel: tpu_custom_call.1
$region0: #{tpu_custom_call.1}
  #allocation0 [shape = 'u32[]', space=smem, size = 0x4, offset = 0x4, fixed_abs, tag = 'smem constant byte address 0x4 - core index']
  #allocation1 [shape = 'u32[144,128]{1,0:T(1,128)}', space=vmem, size = 0x12000, scoped, tag = 'internal scratch']
  %s0 = inlined_call_operand.hbm [shape: f32[16,32], index: 0, kind: input, shape index: {}]
  %s1 = inlined_call_operand.vmem [shape: f32[1,32], index: 1, kind: input, shape index: {}]
  %s2 = inlined_call_operand.vmem [shape: f32[1,32], index: 2, kind: input, shape index: {}]
  %s3 = inlined_call_operand.hbm [shape: f32[16,32], index: 3, kind: output, shape index: {}]
  %s4 = sld [smem:[#allocation0]]
  $region49: #{tpu_custom_call.1} parent=0
    _
  %s6 = ssub.s32 1, %s4
  %s7 = scalar_select 0, %s6, %s4
  $region1: #{tpu_custom_call.1} parent=0
    #allocation2 [shape = 'u8[8192]{0}', space=vmem, size = 0x2000, scoped, tag = 'input window, operand 0']
    #allocation3 [shape = 's32[2]{0}', space=sflag, size = 0x8, scoped, tag = 'scoped memory for tpu_custom_call.1']
    #allocation4 [shape = 's32[2]{0}', space=sflag, size = 0x8, scoped, tag = 'scoped memory for tpu_custom_call.1']
    #allocation5 [shape = 'u8[8192]{0}', space=vmem, size = 0x2000, scoped, tag = 'output window, operand 0']
    %8 = vsyncpa [#allocation3], 0
    %s9 = scalar_lea.sflag [#allocation3], 1
    %10 = vsyncpa %s9, 0
    %11 = vsyncpa [#allocation4], 0
    %s12 = scalar_lea.sflag [#allocation4], 1
    %13 = vsyncpa %s12, 0
    loop: start=0, step=1, limit=4
    $region2: #{tpu_custom_call.1} parent=1 // loop_pre_header
      _
    $region3: #{tpu_custom_call.1} parent=1 // loop_header
      %s15 = sphi 0, %s19
      %p16 = scmp.ge.s32.totalorder %s15, 4
      %s25 = sphi 0, %s27
      %s28 = sphi 0, %s25
      %s29 = sphi 0, %s28
      %s45 = sphi 0, %s29
      %s49 = sphi 0, %s49
      %s51 = sphi 0, %s49
      %s52 = sphi 0, %s51
      %s66 = sphi 0, %s52
      %s70 = sphi 0, %s70
      %s72 = sphi 0, %s70
      %s73 = sphi 0, %s72
      %s87 = sphi 0, %s73
      %s93 = sphi 0, %s95
      %s96 = sphi 0, %s93
      %s97 = sphi 0, %s96
      %s113 = sphi 0, %s97
    $region4: #{tpu_custom_call.1} parent=1 // loop_header_branch
      %18 = sbr.rel (%p16) target = $region8
    $region5: #{tpu_custom_call.1} parent=1 // loop_body
      %s20 = ssub.s32 %s15, 1
      %s21 = ssub.s32 %s15, 2
      %s22 = sadd.s32 %s15, 1
      %s23 = ssub.s32 %s15, %s22
      %p24 = scmp.eq.s32.totalorder %s23, 0
      %s26 = sadd.s32 %s25, 1
      %s27 = scalar_select %p24, %s25, %s26
      %p30 = pneg %p24
      %p31 = scmp.eq.s32.totalorder %s15, 1
      %p32 = por %p30, %p31
      %p33 = scmp.ne.s32.totalorder %s25, %s28
      %p34 = scmp.eq.s32.totalorder %s15, 0
      %p35 = por %p33, %p34
      %p36 = scmp.ne.s32.totalorder %s25, %s28
      %p37 = scmp.eq.s32.totalorder %s20, 1
      %p38 = por %p36, %p37
      %p39 = scmp.ne.s32.totalorder %s28, %s29
      %p40 = scmp.eq.s32.totalorder %s20, 0
      %p41 = por %p39, %p40
      %p42 = scmp.ne.s32.totalorder %s28, %s29
      %p43 = scmp.eq.s32.totalorder %s21, 1
      %p44 = por %p42, %p43
      %p46 = scmp.ne.s32.totalorder %s29, %s45
      %p47 = scmp.eq.s32.totalorder %s21, 0
      %p48 = por %p46, %p47
      %s50 = sadd.s32 %s49, 1
      %p53 = scmp.eq.s32.totalorder %s15, 1
      %p54 = scmp.ne.s32.totalorder %s49, %s51
      %p55 = scmp.eq.s32.totalorder %s15, 0
      %p56 = por %p54, %p55
      %p57 = scmp.ne.s32.totalorder %s49, %s51
      %p58 = scmp.eq.s32.totalorder %s20, 1
      %p59 = por %p57, %p58
      %p60 = scmp.ne.s32.totalorder %s51, %s52
      %p61 = scmp.eq.s32.totalorder %s20, 0
      %p62 = por %p60, %p61
      %p63 = scmp.ne.s32.totalorder %s51, %s52
      %p64 = scmp.eq.s32.totalorder %s21, 1
      %p65 = por %p63, %p64
      %p67 = scmp.ne.s32.totalorder %s52, %s66
      %p68 = scmp.eq.s32.totalorder %s21, 0
      %p69 = por %p67, %p68
      %s71 = sadd.s32 %s70, 1
      %p74 = scmp.eq.s32.totalorder %s15, 1
      %p75 = scmp.ne.s32.totalorder %s70, %s72
      %p76 = scmp.eq.s32.totalorder %s15, 0
      %p77 = por %p75, %p76
      %p78 = scmp.ne.s32.totalorder %s70, %s72
      %p79 = scmp.eq.s32.totalorder %s20, 1
      %p80 = por %p78, %p79
      %p81 = scmp.ne.s32.totalorder %s72, %s73
      %p82 = scmp.eq.s32.totalorder %s20, 0
      %p83 = por %p81, %p82
      %p84 = scmp.ne.s32.totalorder %s72, %s73
      %p85 = scmp.eq.s32.totalorder %s21, 1
      %p86 = por %p84, %p85
      %p88 = scmp.ne.s32.totalorder %s73, %s87
      %p89 = scmp.eq.s32.totalorder %s21, 0
      %p90 = por %p88, %p89
      %s91 = ssub.s32 %s15, %s22
      %p92 = scmp.eq.s32.totalorder %s91, 0
      %s94 = sadd.s32 %s93, 1
      %s95 = scalar_select %p92, %s93, %s94
      %p98 = pneg %p92
      %p99 = scmp.eq.s32.totalorder %s15, 1
      %p100 = por %p98, %p99
      %p101 = scmp.ne.s32.totalorder %s93, %s96
      %p102 = scmp.eq.s32.totalorder %s15, 0
      %p103 = por %p101, %p102
      %p104 = scmp.ne.s32.totalorder %s93, %s96
      %p105 = scmp.eq.s32.totalorder %s20, 1
      %p106 = por %p104, %p105
      %p107 = scmp.ne.s32.totalorder %s96, %s97
      %p108 = scmp.eq.s32.totalorder %s20, 0
      %p109 = por %p107, %p108
      %p110 = scmp.ne.s32.totalorder %s96, %s97
      %p111 = scmp.eq.s32.totalorder %s21, 1
      %p112 = por %p110, %p111
      %p114 = scmp.ne.s32.totalorder %s97, %s113
      %p115 = scmp.eq.s32.totalorder %s21, 0
      %p116 = por %p114, %p115
      %p117 = scmp.le.s32.totalorder 1, %s15
      %p118 = scmp.lt.s32.totalorder %s15, 3
      %p119 = pnand %p117, %p118
      %p120 = pneg %p119
      // Predicated region
      $region9: #{tpu_custom_call.1} parent=5 // pred_check
        _
      $region10: #{tpu_custom_call.1} parent=5 // pred_check_branch
        %122 = sbr.rel (%p119) target = $region12
      $region11: #{tpu_custom_call.1} parent=5 // pred_region
        %s123 = ssub.s32 %s15, 1
        // Predicated region
        $region13: #{tpu_custom_call.1} parent=11 // pred_check
          %p124 = pneg %p62
        $region14: #{tpu_custom_call.1} parent=11 // pred_check_branch
          %126 = sbr.rel (%p124) target = $region16
        $region15: #{tpu_custom_call.1} parent=11 // pred_region
          _
        $region16: #{tpu_custom_call.1} parent=11 // pred_fallthru
          _
        // Predicated region
        $region17: #{tpu_custom_call.1} parent=11 // pred_check
          %p127 = pneg %p83
        $region18: #{tpu_custom_call.1} parent=11 // pred_check_branch
          %129 = sbr.rel (%p127) target = $region20
        $region19: #{tpu_custom_call.1} parent=11 // pred_region
          _
        $region20: #{tpu_custom_call.1} parent=11 // pred_fallthru
          _
      $region12: #{tpu_custom_call.1} parent=5 // pred_fallthru
        _
      %p130 = scmp.lt.s32.totalorder %s15, 2
      // Predicated region
      $region21: #{tpu_custom_call.1} parent=5 // pred_check
        %p131 = pneg %p130
      $region22: #{tpu_custom_call.1} parent=5 // pred_check_branch
        %133 = sbr.rel (%p131) target = $region24
      $region23: #{tpu_custom_call.1} parent=5 // pred_region
        // Predicated region
        $region25: #{tpu_custom_call.1} parent=23 // pred_check
          %p134 = pneg %p35
        $region26: #{tpu_custom_call.1} parent=23 // pred_check_branch
          %136 = sbr.rel (%p134) target = $region28
        $region27: #{tpu_custom_call.1} parent=23 // pred_region
          %s137 = sand.u32 %s25, 1
          %s138 = scalar_lea.sflag [#allocation3], %s137
          %s139 = sand.u32 %s25, 1
          %s140 = smul.addr %s139, 8
          %s141 = scalar_lea.vmem [#allocation2], %s140
          %s143 = ssub.s32 128, 128
          %144 = vsyncadd %s138, %s143
          %s145 = smul.addr %s15, 128
          %s146 = scalar_lea.hbm %s0, %s145
          %s148 = sshll.u32 %s141, 4
          %s149 = int_to_ptr.vmem [resolvable:$true] %s148
          %151 = dma.hbm_to_vmem [thread:$0]  %s146, 128, %s149, %s138
        $region28: #{tpu_custom_call.1} parent=23 // pred_fallthru
          _
      $region24: #{tpu_custom_call.1} parent=5 // pred_fallthru
        _
      %p152 = scmp.le.s32.totalorder 1, %s15
      %p153 = scmp.lt.s32.totalorder %s15, 3
      %p154 = pnand %p152, %p153
      %p155 = pneg %p154
      // Predicated region
      $region29: #{tpu_custom_call.1} parent=5 // pred_check
        _
      $region30: #{tpu_custom_call.1} parent=5 // pred_check_branch
        %157 = sbr.rel (%p154) target = $region32
      $region31: #{tpu_custom_call.1} parent=5 // pred_region
        %s158 = ssub.s32 %s15, 1
        %s159 = sand.u32 %s28, 1
        %s160 = scalar_lea.sflag [#allocation3], %s159
        %s161 = sand.u32 %s28, 1
        %s162 = smul.addr %s161, 8
        %s163 = scalar_lea.vmem [#allocation2], %s162
        // Predicated region
        $region33: #{tpu_custom_call.1} parent=31 // pred_check
          %p164 = pneg %p41
        $region34: #{tpu_custom_call.1} parent=31 // pred_check_branch
          %166 = sbr.rel (%p164) target = $region36
        $region35: #{tpu_custom_call.1} parent=31 // pred_region
          %167 = dma.done %s160, 128
        $region36: #{tpu_custom_call.1} parent=31 // pred_fallthru
          _
        %s168 = sand.u32 %s28, 1
        %s169 = scalar_lea.sflag [#allocation3], %s168
        %s170 = sand.u32 %s28, 1
        %s171 = smul.addr %s170, 8
        %s172 = scalar_lea.vmem [#allocation2], %s171
        %p173 = pneg %p41
        %p174 = pneg %p38
        %p175 = pneg %p62
        %p176 = pneg %p59
        %p177 = pneg %p83
        %p178 = pneg %p80
        %p179 = pneg %p109
        %p180 = pneg %p106
        %s181 = sand.u32 %s96, 1
        %s182 = scalar_lea.sflag [#allocation4], %s181
        %s183 = sand.u32 %s96, 1
        %s184 = smul.addr %s183, 8
        %s185 = scalar_lea.vmem [#allocation5], %s184
        %v186 = vld [vmem:[%s163] sm:$0xff]
        %vm187 = vcmask 261120
        %v188 = vsel %vm187, %v186, 0.0
        %189 = vadd.xlane.f32.xlu0 %v188
        %v190 = vpop.xlane.xlu0 %189
        %v191 = vmul.f32 %v186, %v186
        %v192 = vsel %vm187, %v191, 0.0
        %193 = vadd.xlane.f32.xlu0 %v192
        %v194 = vpop.xlane.xlu0 %193
        %v195 = vmul.f32 %v190, 0.03125
        %v196 = vmul.f32 %v195, %v190
        %v197 = vsub.f32 %v194, %v196
        %v198 = vmax.f32 %v197, 0.0
        %v199 = vmul.f32 %v198, 0.032258064
        %v200 = vrsqrt.pop %v199
        %v201 = vmul.f32 %v199, %v200
        %vm202 = vcmp.eq.f32.partialorder %v199, inf
        %v203 = vsel %vm202, %v199, %v201
        %vm204 = vcmp.eq.f32.partialorder %v199, 0.0
        %v205 = vand.u32 %v199, 2147483648
        %v206 = vsel %vm204, %v205, %v203
        %v207 = vadd.f32 %v206, 1e-06
        %v208 = vrcp.pop %v207
        %v209 = vsub.f32 %v186, %v195
        %v210 = vmul.f32 %v209, %v208
        %v211 = vld [vmem:[%s1] sm:$0x1]
        %v213 = vlaneseq
        %v214 = vshrl.u32 %v213, 7
        %v215 = vsub.s32 0, %v214
        %v216 = vrot.slane %v211, %v215
        %v218 = vmul.f32 %v210, %v216
        %v219 = vld [vmem:[%s2] sm:$0x1]
        %v221 = vlaneseq
        %v222 = vshrl.u32 %v221, 7
        %v223 = vsub.s32 0, %v222
        %v224 = vrot.slane %v219, %v223
        %v226 = vadd.f32 %v218, %v224
        %227 = vst.msk [vmem:[%s185] sm:$0xff] %vm187, %v226
        %s228 = sand.u32 %s96, 1
        %s229 = scalar_lea.sflag [#allocation4], %s228
        %s230 = sand.u32 %s96, 1
        %s231 = smul.addr %s230, 8
        %s232 = scalar_lea.vmem [#allocation5], %s231
        // Predicated region
        $region37: #{tpu_custom_call.1} parent=31 // pred_check
          %p233 = pneg %p106
        $region38: #{tpu_custom_call.1} parent=31 // pred_check_branch
          %235 = sbr.rel (%p233) target = $region40
        $region39: #{tpu_custom_call.1} parent=31 // pred_region
          %s237 = ssub.s32 128, 128
          %238 = vsyncadd %s229, %s237
          %s239 = smul.addr %s20, 128
          %s240 = scalar_lea.hbm %s3, %s239
          %s242 = sshll.u32 %s232, 4
          %s243 = int_to_ptr.vmem [resolvable:$true] %s242
          %245 = dma.vmem_to_hbm [thread:$0]  %s243, 128, %s240, %s229
        $region40: #{tpu_custom_call.1} parent=31 // pred_fallthru
          _
      $region32: #{tpu_custom_call.1} parent=5 // pred_fallthru
        _
      %p246 = scmp.le.s32.totalorder 2, %s15
      // Predicated region
      $region41: #{tpu_custom_call.1} parent=5 // pred_check
        %p247 = pneg %p246
      $region42: #{tpu_custom_call.1} parent=5 // pred_check_branch
        %249 = sbr.rel (%p247) target = $region44
      $region43: #{tpu_custom_call.1} parent=5 // pred_region
        %s250 = ssub.s32 %s15, 2
        // Predicated region
        $region45: #{tpu_custom_call.1} parent=43 // pred_check
          %p251 = pneg %p112
        $region46: #{tpu_custom_call.1} parent=43 // pred_check_branch
          %253 = sbr.rel (%p251) target = $region48
        $region47: #{tpu_custom_call.1} parent=43 // pred_region
          %s254 = sand.u32 %s97, 1
          %s255 = scalar_lea.sflag [#allocation4], %s254
          %s256 = sand.u32 %s97, 1
          %s257 = smul.addr %s256, 8
          %s258 = scalar_lea.vmem [#allocation5], %s257
          %259 = dma.done %s255, 128
        $region48: #{tpu_custom_call.1} parent=43 // pred_fallthru
          _
      $region44: #{tpu_custom_call.1} parent=5 // pred_fallthru
        _
    $region6: #{tpu_custom_call.1} parent=1 // loop_footer
      %s19 = sadd.s32 1, %s15
    $region7: #{tpu_custom_call.1} parent=1 // loop_footer_branch
      %14 = sbr.rel target = $region3
    $region8: #{tpu_custom_call.1} parent=1 // loop_exit
      _
    %260 = vsyncpa [#allocation3], 1
    %s261 = scalar_lea.sflag [#allocation3], 1
    %262 = vsyncpa %s261, 1
    %263 = vsyncpa [#allocation4], 1
    %s264 = scalar_lea.sflag [#allocation4], 1
    %265 = vsyncpa %s264, 1

</llo_original>
